<compile_context>
chip_gen: v5e
topology: v5e:2x2
jax: 0.10.0
libtpu: 0.0.40
codegen_flags: <defaults>
</compile_context>

<pallas_src>
import functools

import jax
import jax.numpy as jnp
from jax import lax
from jax.experimental import pallas as pl
from jax.experimental.pallas import tpu as pltpu

ATTN_EPS = 1e-6   # LinearAttention eps
LN_EPS = 1e-5     # nn.LayerNorm default eps


def _choose_rows_per_block(L, D):
    """Pick T (a divisor of L) so each MXU push sees M = T*L >= ~256 rows while
    the (T*L, D) f32 staging block stays <= ~2 MiB of VMEM."""
    budget_rows = max(256, (2 * 1024 * 1024) // (4 * D))
    T = min(L, max(1, budget_rows // L))
    while L % T:
        T -= 1
    return T


def _pairwise_proj_kernel(x_ref, w_ref, b_ref, lnw_ref, lnb_ref,
                          out_ref, f_ref, *, rows_per_block):
    # Block shapes:
    #   x_ref   : (1, L, D)  one batch element
    #   w_ref   : (C, D)     conv1x1 weight, scale_factor already folded in
    #   b_ref   : (C, 1)     conv1x1 bias
    #   lnw_ref : (C, 1)     LayerNorm weight
    #   lnb_ref : (C, 1)     LayerNorm bias
    #   out_ref : (1, C, N)  lane-dense output, N = L*L
    #   f_ref   : (C, N)     VMEM scratch holding the conv output F
    L = x_ref.shape[1]
    C, N = f_ref.shape

    x = x_ref[0]            # (L, D)
    w = w_ref[...]          # (C, D)
    bias = b_ref[...]       # (C, 1)

    # --- pairwise outer product + 1x1 conv, row-block batched on the MXU ---
    T = rows_per_block
    num_blocks = L // T
    for blk in range(num_blocks):                       # static, small count
        i0 = blk * T
        xi = x[i0:i0 + T, :]                            # (T, D)
        # a[t*L + j, d] = x[i0+t, d] * x[j, d]
        a = (xi[:, None, :] * x[None, :, :]).reshape(T * L, D)      # (T*L, D)
        # F[c, i*L + j] = sum_d w[c,d] * x[i,d] * x[j,d]   (NT matmul)
        fb = lax.dot_general(w, a, (((1,), (1,)), ((), ())),
                             preferred_element_type=jnp.float32)    # (C, T*L)
        f_ref[:, i0 * L:(i0 + T) * L] = fb + bias

    # --- linear attention with Q = K = V = F ; phi(x) = elu(x) + 1 ---
    # (C, N) layout: channels on the sublane axis, n = i*L+j on the lane axis.
    F = f_ref[...]                                                   # (C, N)
    phi = jnp.where(F > 0, F + 1.0, jnp.exp(jnp.minimum(F, 0.0)))    # (C, N)
    k_sum = jnp.sum(phi, axis=1, keepdims=True)                      # (C, 1)
    z = jnp.sum(phi * k_sum, axis=0, keepdims=True) + ATTN_EPS       # (1, N)
    # kvT[e, d] = sum_n F[e, n] * phi[d, n]     (NT matmul)
    kvT = lax.dot_general(f_ref[...], phi, (((1,), (1,)), ((), ())),
                          preferred_element_type=jnp.float32)        # (C, C)
    # ctx[e, n] = sum_d kvT[e, d] * phi[d, n]
    ctx = jnp.dot(kvT, phi, preferred_element_type=jnp.float32)      # (C, N)
    # 1/z is only a (1, N) row, so an exact divide is negligible here and keeps
    # the numerics tight; the (C, N) combine is a broadcast multiply.
    h = f_ref[...] + ctx * (1.0 / z)                                 # (C, N)

    # --- LayerNorm over the channel axis (axis 0 in this layout) ---
    mu = jnp.mean(h, axis=0, keepdims=True)                          # (1, N)
    var = jnp.mean(jnp.square(h - mu), axis=0, keepdims=True)        # (1, N)
    hn = (h - mu) * lax.rsqrt(var + LN_EPS)
    out_ref[0] = hn * lnw_ref[...] + lnb_ref[...]                    # (C, N)


def pairwise_projection(x, conv_w, conv_b, ln_w, ln_b, scale_factor):
    """x: (B, L, D); conv_w: (C, D, 1, 1); returns (B, L, L, C)."""
    B, L, D = x.shape
    C = conv_w.shape[0]
    N = L * L

    x32 = x.astype(jnp.float32)
    scale = jnp.asarray(scale_factor, jnp.float32)
    # Fold scale_factor into the conv weight (scale*(xi*xj) . w == (xi*xj) . (scale*w)).
    w = conv_w.reshape(C, D).astype(jnp.float32) * scale             # (C, D)
    bias = conv_b.reshape(C, 1).astype(jnp.float32)
    lnw = ln_w.reshape(C, 1).astype(jnp.float32)
    lnb = ln_b.reshape(C, 1).astype(jnp.float32)

    rows_per_block = _choose_rows_per_block(L, D)
    kernel = functools.partial(_pairwise_proj_kernel,
                               rows_per_block=rows_per_block)

    out_cn = pl.pallas_call(
        kernel,
        out_shape=jax.ShapeDtypeStruct((B, C, N), jnp.float32),
        grid=(B,),
        in_specs=[
            pl.BlockSpec((1, L, D), lambda b: (b, 0, 0)),   # x
            pl.BlockSpec((C, D), lambda b: (0, 0)),          # conv weight (scaled)
            pl.BlockSpec((C, 1), lambda b: (0, 0)),          # conv bias
            pl.BlockSpec((C, 1), lambda b: (0, 0)),          # LN weight
            pl.BlockSpec((C, 1), lambda b: (0, 0)),          # LN bias
        ],
        out_specs=pl.BlockSpec((1, C, N), lambda b: (b, 0, 0)),
        scratch_shapes=[pltpu.VMEM((C, N), jnp.float32)],
        compiler_params=pltpu.CompilerParams(
            dimension_semantics=("parallel",)),
    )(x32, w, bias, lnw, lnb)

    # Layout fix back to channels-last (B, L, L, C) in the wrapper.
    p = jnp.transpose(out_cn.reshape(B, C, L, L), (0, 2, 3, 1))
    # 0.5 * (p + p.transpose(1, 2)) dropped: exact identity (p[i,j] == p[j,i]).
    if x.dtype == jnp.float16:
        p = p.astype(jnp.float16)
    return p


def _reference(x, conv_w, conv_b, ln_w, ln_b, scale_factor):
    """Pure-JAX reference mirroring the PyTorch forward (eval mode)."""
    x = x.astype(jnp.float32)
    B, L, D = x.shape
    C = conv_w.shape[0]
    w = conv_w.reshape(C, D).astype(jnp.float32)
    pw = scale_factor * (x[:, :, None, :] * x[:, None, :, :])          # (B,L,L,D)
    F = jnp.einsum('bijd,cd->bijc', pw, w) + conv_b                    # (B,L,L,C)
    Ff = F.reshape(B, L * L, C)
    phi = jnp.where(Ff > 0, Ff + 1.0, jnp.exp(jnp.minimum(Ff, 0.0)))
    k_sum = phi.sum(axis=1)                                            # (B,C)
    z = jnp.einsum('bnd,bd->bn', phi, k_sum) + ATTN_EPS
    kv = jnp.einsum('bnd,bne->bde', phi, Ff)
    ctx = jnp.einsum('bnd,bde->bne', phi, kv)
    h = Ff + ctx / z[..., None]
    mu = h.mean(-1, keepdims=True)
    var = ((h - mu) ** 2).mean(-1, keepdims=True)
    hn = (h - mu) / jnp.sqrt(var + LN_EPS) * ln_w + ln_b
    p = hn.reshape(B, L, L, C)
    return 0.5 * (p + jnp.swapaxes(p, 1, 2))


if __name__ == "__main__":
    B, L, D, C = 2, 16, 32, 32     # seq_embed_dim=32, out_channels=32

    key = jax.random.PRNGKey(0)
    k1, k2, k3, k4, k5 = jax.random.split(key, 5)
    x = jax.random.normal(k1, (B, L, D), jnp.float32)
    conv_w = jax.random.normal(k2, (C, D, 1, 1), jnp.float32) * (1.0 / jnp.sqrt(D))
    conv_b = 0.1 * jax.random.normal(k3, (C,), jnp.float32)
    ln_w = jnp.ones((C,), jnp.float32) + 0.1 * jax.random.normal(k4, (C,), jnp.float32)
    ln_b = 0.1 * jax.random.normal(k5, (C,), jnp.float32)
    scale_factor = jnp.float32(1.0)    # nn.Parameter(torch.tensor(1.0))

    out = jax.jit(pairwise_projection)(x, conv_w, conv_b, ln_w, ln_b, scale_factor)
    out = jax.block_until_ready(out)

    assert out.shape == (B, L, L, C), out.shape
    ref = _reference(x, conv_w, conv_b, ln_w, ln_b, scale_factor)
    max_err = float(jnp.max(jnp.abs(out - ref)))
    assert max_err < 5e-4, f"max abs err {max_err}"
    print("KERNEL_OK")
</pallas_src>

<mosaic_0001>
module attributes {stable_mosaic.version = 11 : i64} {
  func.func @_pairwise_proj_kernel(%arg0: i32, %arg1: memref<1x16x32xf32, #tpu.memory_space<vmem>>, %arg2: memref<32x32xf32, #tpu.memory_space<vmem>>, %arg3: memref<32x1xf32, #tpu.memory_space<vmem>>, %arg4: memref<32x1xf32, #tpu.memory_space<vmem>>, %arg5: memref<32x1xf32, #tpu.memory_space<vmem>>, %arg6: memref<1x32x256xf32, #tpu.memory_space<vmem>>, %arg7: memref<32x256xf32, #tpu.memory_space<vmem>>) attributes {dimension_semantics = [#tpu.dimension_semantics<parallel>], iteration_bounds = array<i64: 2>, scalar_prefetch = 0 : i64, scratch_operands = 1 : i64, tpu.core_type = #tpu.core_type<tc>, window_params = [{transform_indices = @transform_0, window_bounds = array<i64: 1, 16, 32>}, {pipeline_mode = #tpu.pipeline_mode<synchronous>, transform_indices = @transform_1, window_bounds = array<i64: 32, 32>}, {pipeline_mode = #tpu.pipeline_mode<synchronous>, transform_indices = @transform_2, window_bounds = array<i64: 32, 1>}, {pipeline_mode = #tpu.pipeline_mode<synchronous>, transform_indices = @transform_3, window_bounds = array<i64: 32, 1>}, {pipeline_mode = #tpu.pipeline_mode<synchronous>, transform_indices = @transform_4, window_bounds = array<i64: 32, 1>}, {transform_indices = @transform_5, window_bounds = array<i64: 1, 32, 256>}]} {
    %c0 = arith.constant 0 : index
    %c0_0 = arith.constant 0 : index
    %c0_1 = arith.constant 0 : index
    %0 = vector.load %arg1[%c0, %c0_0, %c0_1] : memref<1x16x32xf32, #tpu.memory_space<vmem>>, vector<1x16x32xf32>
    %1 = vector.shape_cast %0 : vector<1x16x32xf32> to vector<16x32xf32>
    %c0_2 = arith.constant 0 : index
    %c0_3 = arith.constant 0 : index
    %2 = vector.load %arg2[%c0_2, %c0_3] : memref<32x32xf32, #tpu.memory_space<vmem>>, vector<32x32xf32>
    %c0_4 = arith.constant 0 : index
    %c0_5 = arith.constant 0 : index
    %3 = vector.load %arg3[%c0_4, %c0_5] : memref<32x1xf32, #tpu.memory_space<vmem>>, vector<32x1xf32>
    %4 = vector.shape_cast %1 : vector<16x32xf32> to vector<16x1x32xf32>
    %5 = vector.shape_cast %1 : vector<16x32xf32> to vector<1x16x32xf32>
    %6 = vector.broadcast %4 : vector<16x1x32xf32> to vector<16x16x32xf32>
    %7 = vector.broadcast %5 : vector<1x16x32xf32> to vector<16x16x32xf32>
    %8 = arith.mulf %6, %7 : vector<16x16x32xf32>
    %9 = vector.shape_cast %8 : vector<16x16x32xf32> to vector<256x32xf32>
    %cst = arith.constant dense<0.000000e+00> : vector<32x256xf32>
    %10 = tpu.matmul %2, %9, %cst {dimension_numbers = #tpu.dot_dimension_numbers<[1], [1], [0], [0], [0, 0, 1, 0], [], []>} : vector<32x32xf32>, vector<256x32xf32>, vector<32x256xf32> -> vector<32x256xf32>
    %11 = vector.broadcast %3 : vector<32x1xf32> to vector<32x256xf32>
    %12 = arith.addf %10, %11 : vector<32x256xf32>
    %c0_6 = arith.constant 0 : index
    %c0_7 = arith.constant 0 : index
    %13 = vector.load %arg7[%c0_6, %c0_7] : memref<32x256xf32, #tpu.memory_space<vmem>>, vector<32x256xf32>
    tpu.vector_store %arg7[%c0_6, %c0_7], %12 {strides = array<i32>} : memref<32x256xf32, #tpu.memory_space<vmem>>, vector<32x256xf32>,
    %c0_8 = arith.constant 0 : index
    %c0_9 = arith.constant 0 : index
    %14 = vector.load %arg7[%c0_8, %c0_9] : memref<32x256xf32, #tpu.memory_space<vmem>>, vector<32x256xf32>
    %cst_10 = arith.constant 0.000000e+00 : f32
    %15 = vector.broadcast %cst_10 : f32 to vector<32x256xf32>
    %16 = arith.cmpf ogt, %14, %15 : vector<32x256xf32>
    %cst_11 = arith.constant 1.000000e+00 : f32
    %17 = vector.broadcast %cst_11 : f32 to vector<32x256xf32>
    %18 = arith.addf %14, %17 : vector<32x256xf32>
    %cst_12 = arith.constant 0.000000e+00 : f32
    %19 = vector.broadcast %cst_12 : f32 to vector<32x256xf32>
    %20 = arith.minimumf %14, %19 : vector<32x256xf32>
    %21 = math.exp %20 : vector<32x256xf32>
    %22 = arith.select %16, %18, %21 : vector<32x256xi1>, vector<32x256xf32>
    %cst_13 = arith.constant dense<0.000000e+00> : vector<32xf32>
    %23 = vector.multi_reduction <add>, %22, %cst_13 [1] : vector<32x256xf32> to vector<32xf32>
    %24 = vector.shape_cast %23 : vector<32xf32> to vector<32x1xf32>
    %25 = vector.broadcast %24 : vector<32x1xf32> to vector<32x256xf32>
    %26 = arith.mulf %22, %25 : vector<32x256xf32>
    %cst_14 = arith.constant dense<0.000000e+00> : vector<256xf32>
    %27 = vector.multi_reduction <add>, %26, %cst_14 [0] : vector<32x256xf32> to vector<256xf32>
    %28 = vector.shape_cast %27 : vector<256xf32> to vector<1x256xf32>
    %cst_15 = arith.constant 9.99999997E-7 : f32
    %29 = vector.broadcast %cst_15 : f32 to vector<1x256xf32>
    %30 = arith.addf %28, %29 : vector<1x256xf32>
    %c0_16 = arith.constant 0 : index
    %c0_17 = arith.constant 0 : index
    %31 = vector.load %arg7[%c0_16, %c0_17] : memref<32x256xf32, #tpu.memory_space<vmem>>, vector<32x256xf32>
    %cst_18 = arith.constant dense<0.000000e+00> : vector<32x32xf32>
    %32 = tpu.matmul %31, %22, %cst_18 {dimension_numbers = #tpu.dot_dimension_numbers<[1], [1], [0], [0], [0, 0, 1, 0], [], []>} : vector<32x256xf32>, vector<32x256xf32>, vector<32x32xf32> -> vector<32x32xf32>
    %cst_19 = arith.constant dense<0.000000e+00> : vector<32x256xf32>
    %33 = tpu.matmul %32, %22, %cst_19 {dimension_numbers = #tpu.dot_dimension_numbers<[1], [0], [0], [1], [0, 0, 1, 1], [], []>} : vector<32x32xf32>, vector<32x256xf32>, vector<32x256xf32> -> vector<32x256xf32>
    %c0_20 = arith.constant 0 : index
    %c0_21 = arith.constant 0 : index
    %34 = vector.load %arg7[%c0_20, %c0_21] : memref<32x256xf32, #tpu.memory_space<vmem>>, vector<32x256xf32>
    %cst_22 = arith.constant 1.000000e+00 : f32
    %35 = vector.broadcast %cst_22 : f32 to vector<1x256xf32>
    %36 = arith.divf %35, %30 : vector<1x256xf32>
    %37 = vector.broadcast %36 : vector<1x256xf32> to vector<32x256xf32>
    %38 = arith.mulf %33, %37 : vector<32x256xf32>
    %39 = arith.addf %34, %38 : vector<32x256xf32>
    %cst_23 = arith.constant dense<0.000000e+00> : vector<256xf32>
    %40 = vector.multi_reduction <add>, %39, %cst_23 [0] : vector<32x256xf32> to vector<256xf32>
    %41 = vector.shape_cast %40 : vector<256xf32> to vector<1x256xf32>
    %cst_24 = arith.constant 3.200000e+01 : f32
    %42 = vector.broadcast %cst_24 : f32 to vector<1x256xf32>
    %43 = arith.divf %41, %42 : vector<1x256xf32>
    %44 = vector.broadcast %43 : vector<1x256xf32> to vector<32x256xf32>
    %45 = arith.subf %39, %44 : vector<32x256xf32>
    %46 = arith.mulf %45, %45 : vector<32x256xf32>
    %cst_25 = arith.constant dense<0.000000e+00> : vector<256xf32>
    %47 = vector.multi_reduction <add>, %46, %cst_25 [0] : vector<32x256xf32> to vector<256xf32>
    %48 = vector.shape_cast %47 : vector<256xf32> to vector<1x256xf32>
    %cst_26 = arith.constant 3.200000e+01 : f32
    %49 = vector.broadcast %cst_26 : f32 to vector<1x256xf32>
    %50 = arith.divf %48, %49 : vector<1x256xf32>
    %51 = vector.broadcast %43 : vector<1x256xf32> to vector<32x256xf32>
    %52 = arith.subf %39, %51 : vector<32x256xf32>
    %cst_27 = arith.constant 9.99999974E-6 : f32
    %53 = vector.broadcast %cst_27 : f32 to vector<1x256xf32>
    %54 = arith.addf %50, %53 : vector<1x256xf32>
    %55 = math.rsqrt %54 : vector<1x256xf32>
    %56 = vector.broadcast %55 : vector<1x256xf32> to vector<32x256xf32>
    %57 = arith.mulf %52, %56 : vector<32x256xf32>
    %c0_28 = arith.constant 0 : index
    %c0_29 = arith.constant 0 : index
    %58 = vector.load %arg4[%c0_28, %c0_29] : memref<32x1xf32, #tpu.memory_space<vmem>>, vector<32x1xf32>
    %59 = vector.broadcast %58 : vector<32x1xf32> to vector<32x256xf32>
    %60 = arith.mulf %57, %59 : vector<32x256xf32>
    %c0_30 = arith.constant 0 : index
    %c0_31 = arith.constant 0 : index
    %61 = vector.load %arg5[%c0_30, %c0_31] : memref<32x1xf32, #tpu.memory_space<vmem>>, vector<32x1xf32>
    %62 = vector.broadcast %61 : vector<32x1xf32> to vector<32x256xf32>
    %63 = arith.addf %60, %62 : vector<32x256xf32>
    %c0_32 = arith.constant 0 : index
    %c0_33 = arith.constant 0 : index
    %c0_34 = arith.constant 0 : index
    %64 = vector.load %arg6[%c0_32, %c0_33, %c0_34] : memref<1x32x256xf32, #tpu.memory_space<vmem>>, vector<1x32x256xf32>
    %65 = vector.shape_cast %64 : vector<1x32x256xf32> to vector<32x256xf32>
    %66 = vector.shape_cast %63 : vector<32x256xf32> to vector<1x32x256xf32>
    tpu.vector_store %arg6[%c0_32, %c0_33, %c0_34], %66 {strides = array<i32>} : memref<1x32x256xf32, #tpu.memory_space<vmem>>, vector<1x32x256xf32>,
    return
  }
  func.func @transform_0(%arg0: i32) -> (i32, i32, i32) {
    %c0_i32 = arith.constant 0 : i32
    %c0_i32_0 = arith.constant 0 : i32
    %c0_i32_1 = arith.constant 0 : i32
    return %arg0, %c0_i32, %c0_i32_0 : i32, i32, i32
  }
  func.func @transform_1(%arg0: i32) -> (i32, i32) {
    %c0_i32 = arith.constant 0 : i32
    %c0_i32_0 = arith.constant 0 : i32
    %c0_i32_1 = arith.constant 0 : i32
    return %c0_i32, %c0_i32_0 : i32, i32
  }
  func.func @transform_2(%arg0: i32) -> (i32, i32) {
    %c0_i32 = arith.constant 0 : i32
    %c0_i32_0 = arith.constant 0 : i32
    %c0_i32_1 = arith.constant 0 : i32
    return %c0_i32, %c0_i32_0 : i32, i32
  }
  func.func @transform_3(%arg0: i32) -> (i32, i32) {
    %c0_i32 = arith.constant 0 : i32
    %c0_i32_0 = arith.constant 0 : i32
    %c0_i32_1 = arith.constant 0 : i32
    return %c0_i32, %c0_i32_0 : i32, i32
  }
  func.func @transform_4(%arg0: i32) -> (i32, i32) {
    %c0_i32 = arith.constant 0 : i32
    %c0_i32_0 = arith.constant 0 : i32
    %c0_i32_1 = arith.constant 0 : i32
    return %c0_i32, %c0_i32_0 : i32, i32
  }
  func.func @transform_5(%arg0: i32) -> (i32, i32, i32) {
    %c0_i32 = arith.constant 0 : i32
    %c0_i32_0 = arith.constant 0 : i32
    %c0_i32_1 = arith.constant 0 : i32
    return %arg0, %c0_i32, %c0_i32_0 : i32, i32, i32
  }
}

</mosaic_0001>

<llo_original>
// kernel: pairwise_projection.1
$region0: #{pairwise_projection.1}
  #allocation0 [shape = 'u32[]', space=smem, size = 0x4, offset = 0x4, fixed_abs, tag = 'smem constant byte address 0x4 - core index']
  #allocation1 [shape = 'u32[72,128]{1,0:T(1,128)}', space=vmem, size = 0x9000, scoped, tag = 'internal scratch']
  #allocation2 [shape = 'f32[32,256]{1,0:T(8,128)}', space=vmem, size = 0x8000, scoped, tag = 'scratch operand']
  %s0 = inlined_call_operand.vmem [shape: f32[2,16,32], index: 0, kind: input, shape index: {}]
  %s1 = inlined_call_operand.vmem [shape: f32[32,32], index: 1, kind: input, shape index: {}]
  %s2 = inlined_call_operand.vmem [shape: f32[32,1], index: 2, kind: input, shape index: {}]
  %s3 = inlined_call_operand.vmem [shape: f32[32,1], index: 3, kind: input, shape index: {}]
  %s4 = inlined_call_operand.vmem [shape: f32[32,1], index: 4, kind: input, shape index: {}]
  %s5 = inlined_call_operand.vmem [shape: f32[2,32,256], index: 5, kind: output, shape index: {}]
  %s6 = sld [smem:[#allocation0]]
  $region53: #{pairwise_projection.1} parent=0
    _
  %s8 = ssub.s32 1, %s6
  %s9 = scalar_select 0, %s8, %s6
  loop: start=0, step=1, limit=4
  $region2: #{pairwise_projection.1} parent=0 // loop_pre_header
    _
  $region3: #{pairwise_projection.1} parent=0 // loop_header
    %s11 = sphi 0, %s15
    %p12 = scmp.ge.s32.totalorder %s11, 4
    %s21 = sphi 0, %s23
    %s24 = sphi 0, %s21
    %s25 = sphi 0, %s24
    %s41 = sphi 0, %s25
    %s45 = sphi 0, %s45
    %s47 = sphi 0, %s45
    %s48 = sphi 0, %s47
    %s62 = sphi 0, %s48
    %s66 = sphi 0, %s66
    %s68 = sphi 0, %s66
    %s69 = sphi 0, %s68
    %s83 = sphi 0, %s69
    %s87 = sphi 0, %s87
    %s89 = sphi 0, %s87
    %s90 = sphi 0, %s89
    %s104 = sphi 0, %s90
    %s108 = sphi 0, %s108
    %s110 = sphi 0, %s108
    %s111 = sphi 0, %s110
    %s125 = sphi 0, %s111
    %s131 = sphi 0, %s133
    %s134 = sphi 0, %s131
    %s135 = sphi 0, %s134
    %s151 = sphi 0, %s135
  $region4: #{pairwise_projection.1} parent=0 // loop_header_branch
    %14 = sbr.rel (%p12) target = $region8
  $region5: #{pairwise_projection.1} parent=0 // loop_body
    %s16 = ssub.s32 %s11, 1
    %s17 = ssub.s32 %s11, 2
    %s18 = sadd.s32 %s11, 1
    %s19 = ssub.s32 %s11, %s18
    %p20 = scmp.eq.s32.totalorder %s19, 0
    %s22 = sadd.s32 %s21, 1
    %s23 = scalar_select %p20, %s21, %s22
    %p26 = pneg %p20
    %p27 = scmp.eq.s32.totalorder %s11, 1
    %p28 = por %p26, %p27
    %p29 = scmp.ne.s32.totalorder %s21, %s24
    %p30 = scmp.eq.s32.totalorder %s11, 0
    %p31 = por %p29, %p30
    %p32 = scmp.ne.s32.totalorder %s21, %s24
    %p33 = scmp.eq.s32.totalorder %s16, 1
    %p34 = por %p32, %p33
    %p35 = scmp.ne.s32.totalorder %s24, %s25
    %p36 = scmp.eq.s32.totalorder %s16, 0
    %p37 = por %p35, %p36
    %p38 = scmp.ne.s32.totalorder %s24, %s25
    %p39 = scmp.eq.s32.totalorder %s17, 1
    %p40 = por %p38, %p39
    %p42 = scmp.ne.s32.totalorder %s25, %s41
    %p43 = scmp.eq.s32.totalorder %s17, 0
    %p44 = por %p42, %p43
    %s46 = sadd.s32 %s45, 1
    %p49 = scmp.eq.s32.totalorder %s11, 1
    %p50 = scmp.ne.s32.totalorder %s45, %s47
    %p51 = scmp.eq.s32.totalorder %s11, 0
    %p52 = por %p50, %p51
    %p53 = scmp.ne.s32.totalorder %s45, %s47
    %p54 = scmp.eq.s32.totalorder %s16, 1
    %p55 = por %p53, %p54
    %p56 = scmp.ne.s32.totalorder %s47, %s48
    %p57 = scmp.eq.s32.totalorder %s16, 0
    %p58 = por %p56, %p57
    %p59 = scmp.ne.s32.totalorder %s47, %s48
    %p60 = scmp.eq.s32.totalorder %s17, 1
    %p61 = por %p59, %p60
    %p63 = scmp.ne.s32.totalorder %s48, %s62
    %p64 = scmp.eq.s32.totalorder %s17, 0
    %p65 = por %p63, %p64
    %s67 = sadd.s32 %s66, 1
    %p70 = scmp.eq.s32.totalorder %s11, 1
    %p71 = scmp.ne.s32.totalorder %s66, %s68
    %p72 = scmp.eq.s32.totalorder %s11, 0
    %p73 = por %p71, %p72
    %p74 = scmp.ne.s32.totalorder %s66, %s68
    %p75 = scmp.eq.s32.totalorder %s16, 1
    %p76 = por %p74, %p75
    %p77 = scmp.ne.s32.totalorder %s68, %s69
    %p78 = scmp.eq.s32.totalorder %s16, 0
    %p79 = por %p77, %p78
    %p80 = scmp.ne.s32.totalorder %s68, %s69
    %p81 = scmp.eq.s32.totalorder %s17, 1
    %p82 = por %p80, %p81
    %p84 = scmp.ne.s32.totalorder %s69, %s83
    %p85 = scmp.eq.s32.totalorder %s17, 0
    %p86 = por %p84, %p85
    %s88 = sadd.s32 %s87, 1
    %p91 = scmp.eq.s32.totalorder %s11, 1
    %p92 = scmp.ne.s32.totalorder %s87, %s89
    %p93 = scmp.eq.s32.totalorder %s11, 0
    %p94 = por %p92, %p93
    %p95 = scmp.ne.s32.totalorder %s87, %s89
    %p96 = scmp.eq.s32.totalorder %s16, 1
    %p97 = por %p95, %p96
    %p98 = scmp.ne.s32.totalorder %s89, %s90
    %p99 = scmp.eq.s32.totalorder %s16, 0
    %p100 = por %p98, %p99
    %p101 = scmp.ne.s32.totalorder %s89, %s90
    %p102 = scmp.eq.s32.totalorder %s17, 1
    %p103 = por %p101, %p102
    %p105 = scmp.ne.s32.totalorder %s90, %s104
    %p106 = scmp.eq.s32.totalorder %s17, 0
    %p107 = por %p105, %p106
    %s109 = sadd.s32 %s108, 1
    %p112 = scmp.eq.s32.totalorder %s11, 1
    %p113 = scmp.ne.s32.totalorder %s108, %s110
    %p114 = scmp.eq.s32.totalorder %s11, 0
    %p115 = por %p113, %p114
    %p116 = scmp.ne.s32.totalorder %s108, %s110
    %p117 = scmp.eq.s32.totalorder %s16, 1
    %p118 = por %p116, %p117
    %p119 = scmp.ne.s32.totalorder %s110, %s111
    %p120 = scmp.eq.s32.totalorder %s16, 0
    %p121 = por %p119, %p120
    %p122 = scmp.ne.s32.totalorder %s110, %s111
    %p123 = scmp.eq.s32.totalorder %s17, 1
    %p124 = por %p122, %p123
    %p126 = scmp.ne.s32.totalorder %s111, %s125
    %p127 = scmp.eq.s32.totalorder %s17, 0
    %p128 = por %p126, %p127
    %s129 = ssub.s32 %s11, %s18
    %p130 = scmp.eq.s32.totalorder %s129, 0
    %s132 = sadd.s32 %s131, 1
    %s133 = scalar_select %p130, %s131, %s132
    %p136 = pneg %p130
    %p137 = scmp.eq.s32.totalorder %s11, 1
    %p138 = por %p136, %p137
    %p139 = scmp.ne.s32.totalorder %s131, %s134
    %p140 = scmp.eq.s32.totalorder %s11, 0
    %p141 = por %p139, %p140
    %p142 = scmp.ne.s32.totalorder %s131, %s134
    %p143 = scmp.eq.s32.totalorder %s16, 1
    %p144 = por %p142, %p143
    %p145 = scmp.ne.s32.totalorder %s134, %s135
    %p146 = scmp.eq.s32.totalorder %s16, 0
    %p147 = por %p145, %p146
    %p148 = scmp.ne.s32.totalorder %s134, %s135
    %p149 = scmp.eq.s32.totalorder %s17, 1
    %p150 = por %p148, %p149
    %p152 = scmp.ne.s32.totalorder %s135, %s151
    %p153 = scmp.eq.s32.totalorder %s17, 0
    %p154 = por %p152, %p153
    %p155 = scmp.le.s32.totalorder 1, %s11
    %p156 = scmp.lt.s32.totalorder %s11, 3
    %p157 = pnand %p155, %p156
    %p158 = pneg %p157
    // Predicated region
    $region9: #{pairwise_projection.1} parent=5 // pred_check
      _
    $region10: #{pairwise_projection.1} parent=5 // pred_check_branch
      %160 = sbr.rel (%p157) target = $region12
    $region11: #{pairwise_projection.1} parent=5 // pred_region
      %s161 = ssub.s32 %s11, 1
      // Predicated region
      $region13: #{pairwise_projection.1} parent=11 // pred_check
        %p162 = pneg %p58
      $region14: #{pairwise_projection.1} parent=11 // pred_check_branch
        %164 = sbr.rel (%p162) target = $region16
      $region15: #{pairwise_projection.1} parent=11 // pred_region
        _
      $region16: #{pairwise_projection.1} parent=11 // pred_fallthru
        _
      // Predicated region
      $region17: #{pairwise_projection.1} parent=11 // pred_check
        %p165 = pneg %p79
      $region18: #{pairwise_projection.1} parent=11 // pred_check_branch
        %167 = sbr.rel (%p165) target = $region20
      $region19: #{pairwise_projection.1} parent=11 // pred_region
        _
      $region20: #{pairwise_projection.1} parent=11 // pred_fallthru
        _
      // Predicated region
      $region21: #{pairwise_projection.1} parent=11 // pred_check
        %p168 = pneg %p100
      $region22: #{pairwise_projection.1} parent=11 // pred_check_branch
        %170 = sbr.rel (%p168) target = $region24
      $region23: #{pairwise_projection.1} parent=11 // pred_region
        _
      $region24: #{pairwise_projection.1} parent=11 // pred_fallthru
        _
      // Predicated region
      $region25: #{pairwise_projection.1} parent=11 // pred_check
        %p171 = pneg %p121
      $region26: #{pairwise_projection.1} parent=11 // pred_check_branch
        %173 = sbr.rel (%p171) target = $region28
      $region27: #{pairwise_projection.1} parent=11 // pred_region
        _
      $region28: #{pairwise_projection.1} parent=11 // pred_fallthru
        _
    $region12: #{pairwise_projection.1} parent=5 // pred_fallthru
      _
    %p174 = scmp.lt.s32.totalorder %s11, 2
    // Predicated region
    $region29: #{pairwise_projection.1} parent=5 // pred_check
      %p175 = pneg %p174
    $region30: #{pairwise_projection.1} parent=5 // pred_check_branch
      %177 = sbr.rel (%p175) target = $region32
    $region31: #{pairwise_projection.1} parent=5 // pred_region
      // Predicated region
      $region33: #{pairwise_projection.1} parent=31 // pred_check
        %p178 = pneg %p31
      $region34: #{pairwise_projection.1} parent=31 // pred_check_branch
        %180 = sbr.rel (%p178) target = $region36
      $region35: #{pairwise_projection.1} parent=31 // pred_region
        %p181 = scmp.lt.s32.totalorder %s11, 1
        %s182 = scalar_select %p181, %s11, 1
        %s183 = smul.addr %s182, 2
        %s184 = smul.addr %s183, 8
        %s185 = scalar_lea.vmem %s0, %s184
      $region36: #{pairwise_projection.1} parent=31 // pred_fallthru
        _
    $region32: #{pairwise_projection.1} parent=5 // pred_fallthru
      _
    %p186 = scmp.le.s32.totalorder 1, %s11
    %p187 = scmp.lt.s32.totalorder %s11, 3
    %p188 = pnand %p186, %p187
    %p189 = pneg %p188
    // Predicated region
    $region37: #{pairwise_projection.1} parent=5 // pred_check
      _
    $region38: #{pairwise_projection.1} parent=5 // pred_check_branch
      %191 = sbr.rel (%p188) target = $region40
    $region39: #{pairwise_projection.1} parent=5 // pred_region
      %s192 = ssub.s32 %s11, 1
      %p193 = scmp.lt.s32.totalorder %s16, 1
      %s194 = scalar_select %p193, %s16, 1
      %s195 = smul.addr %s194, 2
      %s196 = smul.addr %s195, 8
      %s197 = scalar_lea.vmem %s0, %s196
      %p198 = pneg %p37
      %p199 = pneg %p34
      %p200 = pneg %p58
      %p201 = pneg %p55
      %p202 = pneg %p79
      %p203 = pneg %p76
      %p204 = pneg %p100
      %p205 = pneg %p97
      %p206 = pneg %p121
      %p207 = pneg %p118
      %p208 = pneg %p147
      %p209 = pneg %p144
      %p210 = scmp.lt.s32.totalorder %s16, 1
      %s211 = scalar_select %p210, %s16, 1
      %s212 = smul.addr %s211, 8
      %s213 = smul.addr %s212, 8
      %s214 = scalar_lea.vmem %s5, %s213
      %p215 = scmp.lt.s32.totalorder %s16, 1
      %s216 = scalar_select %p215, %s16, 1
      %s217 = smul.addr %s216, 2
      %s218 = smul.addr %s217, 8
      %s219 = scalar_lea.vmem %s0, %s218
      %p220 = scmp.lt.s32.totalorder %s16, 1
      %s221 = scalar_select %p220, %s16, 1
      %s222 = smul.addr %s221, 8
      %s223 = smul.addr %s222, 8
      %s224 = scalar_lea.vmem %s5, %s223
      %v225 = vld [vmem:[%s219] sm:$0xff]
      %v226 = vld [vmem:[%s219 + $0x8] sm:$0xff]
      %v227 = vld [vmem:[%s1] sm:$0xff]
      %v228 = vld [vmem:[%s1 + $0x8] sm:$0xff]
      %v229 = vld [vmem:[%s1 + $0x10] sm:$0xff]
      %v230 = vld [vmem:[%s1 + $0x18] sm:$0xff]
      %v231 = vld [vmem:[%s2] sm:$0xff]
      %v232 = vld [vmem:[%s2 + $0x8] sm:$0xff]
      %v233 = vld [vmem:[%s2 + $0x10] sm:$0xff]
      %v234 = vld [vmem:[%s2 + $0x18] sm:$0xff]
      %v237 = vrot.slane %v225, 1
      %v238 = vrot.slane %v225, 2
      %v239 = vrot.slane %v225, 3
      %v240 = vrot.slane %v225, 4
      %v241 = vrot.slane %v225, 5
      %v242 = vrot.slane %v225, 6
      %v243 = vrot.slane %v225, 7
      %v244 = vrot.slane %v226, 1
      %v245 = vrot.slane %v226, 2
      %v246 = vrot.slane %v226, 3
      %v247 = vrot.slane %v226, 4
      %v248 = vrot.slane %v226, 5
      %v249 = vrot.slane %v226, 6
      %v250 = vrot.slane %v226, 7
      %v251 = vperm.slane %v225, 0
      %v252 = vperm.slane %v237, 0
      %v253 = vperm.slane %v238, 0
      %v254 = vperm.slane %v239, 0
      %v255 = vperm.slane %v240, 0
      %v256 = vperm.slane %v241, 0
      %v257 = vperm.slane %v242, 0
      %v258 = vperm.slane %v243, 0
      %v259 = vperm.slane %v226, 0
      %v260 = vperm.slane %v244, 0
      %v261 = vperm.slane %v245, 0
      %v262 = vperm.slane %v246, 0
      %v263 = vperm.slane %v247, 0
      %v264 = vperm.slane %v248, 0
      %v265 = vperm.slane %v249, 0
      %v266 = vperm.slane %v250, 0
      %v283 = vmul.f32 %v251, %v225
      %v284 = vmul.f32 %v251, %v226
      %v285 = vmul.f32 %v252, %v225
      %v286 = vmul.f32 %v252, %v226
      %v287 = vmul.f32 %v253, %v225
      %v288 = vmul.f32 %v253, %v226
      %v289 = vmul.f32 %v254, %v225
      %v290 = vmul.f32 %v254, %v226
      %v291 = vmul.f32 %v255, %v225
      %v292 = vmul.f32 %v255, %v226
      %v293 = vmul.f32 %v256, %v225
      %v294 = vmul.f32 %v256, %v226
      %v295 = vmul.f32 %v257, %v225
      %v296 = vmul.f32 %v257, %v226
      %v297 = vmul.f32 %v258, %v225
      %v298 = vmul.f32 %v258, %v226
      %v299 = vmul.f32 %v259, %v225
      %v300 = vmul.f32 %v259, %v226
      %v301 = vmul.f32 %v260, %v225
      %v302 = vmul.f32 %v260, %v226
      %v303 = vmul.f32 %v261, %v225
      %v304 = vmul.f32 %v261, %v226
      %v305 = vmul.f32 %v262, %v225
      %v306 = vmul.f32 %v262, %v226
      %v307 = vmul.f32 %v263, %v225
      %v308 = vmul.f32 %v263, %v226
      %v309 = vmul.f32 %v264, %v225
      %v310 = vmul.f32 %v264, %v226
      %v311 = vmul.f32 %v265, %v225
      %v312 = vmul.f32 %v265, %v226
      %v313 = vmul.f32 %v266, %v225
      %v314 = vmul.f32 %v266, %v226
      %316 = vset.pattern.permute.xlu0 0
      %317 = vperm.xlu0 %316, %v231
      %v318 = vpop.permute.xlu0 %317
      %321 = vset.pattern.permute.xlu0 0
      %322 = vperm.xlu0 %321, %v232
      %v323 = vpop.permute.xlu0 %322
      %326 = vset.pattern.permute.xlu0 0
      %327 = vperm.xlu0 %326, %v233
      %v328 = vpop.permute.xlu0 %327
      %331 = vset.pattern.permute.xlu0 0
      %332 = vperm.xlu0 %331, %v234
      %v333 = vpop.permute.xlu0 %332
      %vm335 = vcmask 261120
      %v337 = vsel %vm335, %v227, 0
      %v340 = vsel %vm335, %v228, 0
      %v343 = vsel %vm335, %v229, 0
      %v346 = vsel %vm335, %v230, 0
      %v349 = vsel %vm335, %v283, 0
      %v352 = vsel %vm335, %v284, 0
      %v355 = vsel %vm335, %v285, 0
      %v358 = vsel %vm335, %v286, 0
      %v361 = vsel %vm335, %v287, 0
      %v364 = vsel %vm335, %v288, 0
      %v367 = vsel %vm335, %v289, 0
      %v370 = vsel %vm335, %v290, 0
      %v373 = vsel %vm335, %v291, 0
      %v376 = vsel %vm335, %v292, 0
      %v379 = vsel %vm335, %v293, 0
      %v382 = vsel %vm335, %v294, 0
      %v385 = vsel %vm335, %v295, 0
      %v388 = vsel %vm335, %v296, 0
      %v391 = vsel %vm335, %v297, 0
      %v394 = vsel %vm335, %v298, 0
      %v397 = vsel %vm335, %v299, 0
      %v400 = vsel %vm335, %v300, 0
      %v403 = vsel %vm335, %v301, 0
      %v406 = vsel %vm335, %v302, 0
      %v409 = vsel %vm335, %v303, 0
      %v412 = vsel %vm335, %v304, 0
      %v415 = vsel %vm335, %v305, 0
      %v418 = vsel %vm335, %v306, 0
      %v421 = vsel %vm335, %v307, 0
      %v424 = vsel %vm335, %v308, 0
      %v427 = vsel %vm335, %v309, 0
      %v430 = vsel %vm335, %v310, 0
      %v433 = vsel %vm335, %v311, 0
      %v436 = vsel %vm335, %v312, 0
      %v439 = vsel %vm335, %v313, 0
      %v442 = vsel %vm335, %v314, 0
      %444 = vmatpush.xpose.msra.mxu0 %v394
      %445 = vmatpush.xpose.msra.mxu0 %v391
      %446 = vmatpush.xpose.msra.mxu0 %v388
      %447 = vmatpush.xpose.msra.mxu0 %v385
      %448 = vmatpush.xpose.msra.mxu0 %v382
      %449 = vmatpush.xpose.msra.mxu0 %v379
      %450 = vmatpush.xpose.msra.mxu0 %v376
      %451 = vmatpush.xpose.msra.mxu0 %v373
      %452 = vmatpush.xpose.msra.mxu0 %v370
      %453 = vmatpush.xpose.msra.mxu0 %v367
      %454 = vmatpush.xpose.msra.mxu0 %v364
      %455 = vmatpush.xpose.msra.mxu0 %v361
      %456 = vmatpush.xpose.msra.mxu0 %v358
      %457 = vmatpush.xpose.msra.mxu0 %v355
      %458 = vmatpush.xpose.msra.mxu0 %v352
      %459 = vmatpush.xpose.msra.mxu0 %v349
      %460 = vmatmul.f32.gmra.mxu0 %v337
      %v461 = vpop.f32.mrf.mxu0
      %v462 = vadd.f32 %v318, %v461
      %463 = vmatmul.f32.gmra.mxu0 %v340
      %v464 = vpop.f32.mrf.mxu0
      %v465 = vadd.f32 %v323, %v464
      %466 = vmatmul.f32.gmra.mxu0 %v343
      %v467 = vpop.f32.mrf.mxu0
      %v468 = vadd.f32 %v328, %v467
      %469 = vmatmul.f32.gmra.mxu0 %v346
      %v470 = vpop.f32.mrf.mxu0
      %v471 = vadd.f32 %v333, %v470
      %472 = vdwg.mxu0
      %473 = vmatpush.xpose.msra.mxu0 %v442
      %474 = vmatpush.xpose.msra.mxu0 %v439
      %475 = vmatpush.xpose.msra.mxu0 %v436
      %476 = vmatpush.xpose.msra.mxu0 %v433
      %477 = vmatpush.xpose.msra.mxu0 %v430
      %478 = vmatpush.xpose.msra.mxu0 %v427
      %479 = vmatpush.xpose.msra.mxu0 %v424
      %480 = vmatpush.xpose.msra.mxu0 %v421
      %481 = vmatpush.xpose.msra.mxu0 %v418
      %482 = vmatpush.xpose.msra.mxu0 %v415
      %483 = vmatpush.xpose.msra.mxu0 %v412
      %484 = vmatpush.xpose.msra.mxu0 %v409
      %485 = vmatpush.xpose.msra.mxu0 %v406
      %486 = vmatpush.xpose.msra.mxu0 %v403
      %487 = vmatpush.xpose.msra.mxu0 %v400
      %488 = vmatpush.xpose.msra.mxu0 %v397
      %489 = vmatmul.f32.gmra.mxu0 %v337
      %v490 = vpop.f32.mrf.mxu0
      %v491 = vadd.f32 %v318, %v490
      %492 = vmatmul.f32.gmra.mxu0 %v340
      %v493 = vpop.f32.mrf.mxu0
      %v494 = vadd.f32 %v323, %v493
      %495 = vmatmul.f32.gmra.mxu0 %v343
      %v496 = vpop.f32.mrf.mxu0
      %v497 = vadd.f32 %v328, %v496
      %498 = vmatmul.f32.gmra.mxu0 %v346
      %v499 = vpop.f32.mrf.mxu0
      %v500 = vadd.f32 %v333, %v499
      %501 = vdwg.mxu0
      %502 = vst [vmem:[#allocation2] sm:$0xff] %v462
      %503 = vst [vmem:[#allocation2 + $0x8] sm:$0xff] %v491
      %504 = vst [vmem:[#allocation2 + $0x10] sm:$0xff] %v465
      %505 = vst [vmem:[#allocation2 + $0x18] sm:$0xff] %v494
      %506 = vst [vmem:[#allocation2 + $0x20] sm:$0xff] %v468
      %507 = vst [vmem:[#allocation2 + $0x28] sm:$0xff] %v497
      %508 = vst [vmem:[#allocation2 + $0x30] sm:$0xff] %v471
      %509 = vst [vmem:[#allocation2 + $0x38] sm:$0xff] %v500
      %v510 = vld [vmem:[#allocation2] sm:$0xff]
      %v511 = vld [vmem:[#allocation2 + $0x8] sm:$0xff]
      %v512 = vld [vmem:[#allocation2 + $0x10] sm:$0xff]
      %v513 = vld [vmem:[#allocation2 + $0x18] sm:$0xff]
      %v514 = vld [vmem:[#allocation2 + $0x20] sm:$0xff]
      %v515 = vld [vmem:[#allocation2 + $0x28] sm:$0xff]
      %v516 = vld [vmem:[#allocation2 + $0x30] sm:$0xff]
      %v517 = vld [vmem:[#allocation2 + $0x38] sm:$0xff]
      %vm518 = vcmp.gt.f32.partialorder %v510, 0.0
      %vm519 = vcmp.gt.f32.partialorder %v511, 0.0
      %vm520 = vcmp.gt.f32.partialorder %v512, 0.0
      %vm521 = vcmp.gt.f32.partialorder %v513, 0.0
      %vm522 = vcmp.gt.f32.partialorder %v514, 0.0
      %vm523 = vcmp.gt.f32.partialorder %v515, 0.0
      %vm524 = vcmp.gt.f32.partialorder %v516, 0.0
      %vm525 = vcmp.gt.f32.partialorder %v517, 0.0
      %v526 = vadd.f32 %v510, 1.0
      %v527 = vadd.f32 %v511, 1.0
      %v528 = vadd.f32 %v512, 1.0
      %v529 = vadd.f32 %v513, 1.0
      %v530 = vadd.f32 %v514, 1.0
      %v531 = vadd.f32 %v515, 1.0
      %v532 = vadd.f32 %v516, 1.0
      %v533 = vadd.f32 %v517, 1.0
      %v534 = vmin.f32 %v510, 0.0
      %v535 = vmin.f32 %v511, 0.0
      %v536 = vmin.f32 %v512, 0.0
      %v537 = vmin.f32 %v513, 0.0
      %v538 = vmin.f32 %v514, 0.0
      %v539 = vmin.f32 %v515, 0.0
      %v540 = vmin.f32 %v516, 0.0
      %v541 = vmin.f32 %v517, 0.0
      %v542 = vmul.f32 %v534, 1.442695
      %v543 = vpow.pop %v542
      %v544 = vmul.f32 %v535, 1.442695
      %v545 = vpow.pop %v544
      %v546 = vmul.f32 %v536, 1.442695
      %v547 = vpow.pop %v546
      %v548 = vmul.f32 %v537, 1.442695
      %v549 = vpow.pop %v548
      %v550 = vmul.f32 %v538, 1.442695
      %v551 = vpow.pop %v550
      %v552 = vmul.f32 %v539, 1.442695
      %v553 = vpow.pop %v552
      %v554 = vmul.f32 %v540, 1.442695
      %v555 = vpow.pop %v554
      %v556 = vmul.f32 %v541, 1.442695
      %v557 = vpow.pop %v556
      %v558 = vsel %vm518, %v526, %v543
      %v559 = vsel %vm519, %v527, %v545
      %v560 = vsel %vm520, %v528, %v547
      %v561 = vsel %vm521, %v529, %v549
      %v562 = vsel %vm522, %v530, %v551
      %v563 = vsel %vm523, %v531, %v553
      %v564 = vsel %vm524, %v532, %v555
      %v565 = vsel %vm525, %v533, %v557
      %v566 = vadd.f32 %v558, %v559
      %567 = vadd.xlane.f32.xlu0 %v566
      %v568 = vpop.xlane.xlu0 %567
      %v569 = vadd.f32 %v560, %v561
      %570 = vadd.xlane.f32.xlu0 %v569
      %v571 = vpop.xlane.xlu0 %570
      %v572 = vadd.f32 %v562, %v563
      %573 = vadd.xlane.f32.xlu0 %v572
      %v574 = vpop.xlane.xlu0 %573
      %v575 = vadd.f32 %v564, %v565
      %576 = vadd.xlane.f32.xlu0 %v575
      %v577 = vpop.xlane.xlu0 %576
      %v578 = vmul.f32 %v558, %v568
      %v579 = vmul.f32 %v559, %v568
      %v580 = vmul.f32 %v560, %v571
      %v581 = vmul.f32 %v561, %v571
      %v582 = vmul.f32 %v562, %v574
      %v583 = vmul.f32 %v563, %v574
      %v584 = vmul.f32 %v564, %v577
      %v585 = vmul.f32 %v565, %v577
      %v586 = vadd.f32 %v578, %v580
      %v587 = vadd.f32 %v586, %v582
      %v588 = vadd.f32 %v587, %v584
      %v589 = vrot.slane %v588, 4
      %v590 = vadd.f32 %v588, %v589
      %v591 = vrot.slane %v590, 2
      %v592 = vadd.f32 %v590, %v591
      %v593 = vrot.slane %v592, 1
      %v594 = vadd.f32 %v592, %v593
      %v595 = vadd.f32 %v579, %v581
      %v596 = vadd.f32 %v595, %v583
      %v597 = vadd.f32 %v596, %v585
      %v598 = vrot.slane %v597, 4
      %v599 = vadd.f32 %v597, %v598
      %v600 = vrot.slane %v599, 2
      %v601 = vadd.f32 %v599, %v600
      %v602 = vrot.slane %v601, 1
      %v603 = vadd.f32 %v601, %v602
      %v604 = vadd.f32 %v594, 1e-06
      %v605 = vadd.f32 %v603, 1e-06
      %606 = vmatpush.xpose.msra.mxu0 0.0
      %607 = vmatpush.xpose.msra.mxu0 0.0
      %608 = vmatpush.xpose.msra.mxu0 0.0
      %609 = vmatpush.xpose.msra.mxu0 0.0
      %610 = vmatpush.xpose.msra.mxu0 0.0
      %611 = vmatpush.xpose.msra.mxu0 0.0
      %612 = vmatpush.xpose.msra.mxu0 0.0
      %613 = vmatpush.xpose.msra.mxu0 0.0
      %614 = vmatpush.xpose.msra.mxu0 0.0
      %615 = vmatpush.xpose.msra.mxu0 0.0
      %616 = vmatpush.xpose.msra.mxu0 0.0
      %617 = vmatpush.xpose.msra.mxu0 0.0
      %618 = vmatpush.xpose.msra.mxu0 %v564
      %619 = vmatpush.xpose.msra.mxu0 %v562
      %620 = vmatpush.xpose.msra.mxu0 %v560
      %621 = vmatpush.xpose.msra.mxu0 %v558
      %622 = vmatmul.f32.gmra.mxu0 %v510
      %v623 = vpop.f32.mrf.mxu0
      %v624 = vadd.f32 0.0, %v623
      %625 = vmatmul.f32.gmra.mxu0 %v512
      %v626 = vpop.f32.mrf.mxu0
      %v627 = vadd.f32 0.0, %v626
      %628 = vmatmul.f32.gmra.mxu0 %v514
      %v629 = vpop.f32.mrf.mxu0
      %v630 = vadd.f32 0.0, %v629
      %631 = vmatmul.f32.gmra.mxu0 %v516
      %v632 = vpop.f32.mrf.mxu0
      %v633 = vadd.f32 0.0, %v632
      %634 = vdwg.mxu0
      %635 = vmatpush.xpose.msra.mxu0 0.0
      %636 = vmatpush.xpose.msra.mxu0 0.0
      %637 = vmatpush.xpose.msra.mxu0 0.0
      %638 = vmatpush.xpose.msra.mxu0 0.0
      %639 = vmatpush.xpose.msra.mxu0 0.0
      %640 = vmatpush.xpose.msra.mxu0 0.0
      %641 = vmatpush.xpose.msra.mxu0 0.0
      %642 = vmatpush.xpose.msra.mxu0 0.0
      %643 = vmatpush.xpose.msra.mxu0 0.0
      %644 = vmatpush.xpose.msra.mxu0 0.0
      %645 = vmatpush.xpose.msra.mxu0 0.0
      %646 = vmatpush.xpose.msra.mxu0 0.0
      %647 = vmatpush.xpose.msra.mxu0 %v565
      %648 = vmatpush.xpose.msra.mxu0 %v563
      %649 = vmatpush.xpose.msra.mxu0 %v561
      %650 = vmatpush.xpose.msra.mxu0 %v559
      %651 = vmatmul.f32.gmra.mxu0 %v511
      %v652 = vpop.f32.mrf.mxu0
      %v653 = vadd.f32 %v624, %v652
      %654 = vmatmul.f32.gmra.mxu0 %v513
      %v655 = vpop.f32.mrf.mxu0
      %v656 = vadd.f32 %v627, %v655
      %657 = vmatmul.f32.gmra.mxu0 %v515
      %v658 = vpop.f32.mrf.mxu0
      %v659 = vadd.f32 %v630, %v658
      %660 = vmatmul.f32.gmra.mxu0 %v517
      %v661 = vpop.f32.mrf.mxu0
      %v662 = vadd.f32 %v633, %v661
      %663 = vdwg.mxu0
      %v665 = vsel %vm335, %v653, 0
      %v668 = vsel %vm335, %v656, 0
      %v671 = vsel %vm335, %v659, 0
      %v674 = vsel %vm335, %v662, 0
      %676 = vmatpush.msra.mxu0 0.0
      %677 = vmatpush.msra.mxu0 0.0
      %678 = vmatpush.msra.mxu0 0.0
      %679 = vmatpush.msra.mxu0 0.0
      %680 = vmatpush.msra.mxu0 0.0
      %681 = vmatpush.msra.mxu0 0.0
      %682 = vmatpush.msra.mxu0 0.0
      %683 = vmatpush.msra.mxu0 0.0
      %684 = vmatpush.msra.mxu0 0.0
      %685 = vmatpush.msra.mxu0 0.0
      %686 = vmatpush.msra.mxu0 0.0
      %687 = vmatpush.msra.mxu0 0.0
      %688 = vmatpush.msra.mxu0 %v564
      %689 = vmatpush.msra.mxu0 %v562
      %690 = vmatpush.msra.mxu0 %v560
      %691 = vmatpush.msra.mxu0 %v558
      %692 = vmatmul.f32.gmra.mxu0 %v665
      %v693 = vpop.f32.mrf.mxu0
      %v694 = vadd.f32 0.0, %v693
      %695 = vmatmul.f32.gmra.mxu0 %v668
      %v696 = vpop.f32.mrf.mxu0
      %v697 = vadd.f32 0.0, %v696
      %698 = vmatmul.f32.gmra.mxu0 %v671
      %v699 = vpop.f32.mrf.mxu0
      %v700 = vadd.f32 0.0, %v699
      %701 = vmatmul.f32.gmra.mxu0 %v674
      %v702 = vpop.f32.mrf.mxu0
      %v703 = vadd.f32 0.0, %v702
      %704 = vdwg.mxu0
      %705 = vmatpush.msra.mxu0 0.0
      %706 = vmatpush.msra.mxu0 0.0
      %707 = vmatpush.msra.mxu0 0.0
      %708 = vmatpush.msra.mxu0 0.0
      %709 = vmatpush.msra.mxu0 0.0
      %710 = vmatpush.msra.mxu0 0.0
      %711 = vmatpush.msra.mxu0 0.0
      %712 = vmatpush.msra.mxu0 0.0
      %713 = vmatpush.msra.mxu0 0.0
      %714 = vmatpush.msra.mxu0 0.0
      %715 = vmatpush.msra.mxu0 0.0
      %716 = vmatpush.msra.mxu0 0.0
      %717 = vmatpush.msra.mxu0 %v565
      %718 = vmatpush.msra.mxu0 %v563
      %719 = vmatpush.msra.mxu0 %v561
      %720 = vmatpush.msra.mxu0 %v559
      %721 = vmatmul.f32.gmra.mxu0 %v665
      %v722 = vpop.f32.mrf.mxu0
      %v723 = vadd.f32 0.0, %v722
      %724 = vmatmul.f32.gmra.mxu0 %v668
      %v725 = vpop.f32.mrf.mxu0
      %v726 = vadd.f32 0.0, %v725
      %727 = vmatmul.f32.gmra.mxu0 %v671
      %v728 = vpop.f32.mrf.mxu0
      %v729 = vadd.f32 0.0, %v728
      %730 = vmatmul.f32.gmra.mxu0 %v674
      %v731 = vpop.f32.mrf.mxu0
      %v732 = vadd.f32 0.0, %v731
      %733 = vdwg.mxu0
      %v734 = vrcp.pop %v604
      %v735 = vmul.f32 %v604, %v734
      %v736 = vsub.f32 1.0, %v735
      %v737 = vmul.f32 %v734, %v736
      %v738 = vadd.f32 %v734, %v737
      %vm739 = vweird.f32 %v604
      %vm740 = vweird.f32 %v734
      %vm741 = vmor %vm739, %vm740
      %v742 = vsel %vm741, %v734, %v738
      %v743 = vand.u32 2147483647, %v604
      %vm744 = vcmp.eq.f32.partialorder %v743, 8.507059e+37
      %v745 = vand.u32 %v604, 2147483648
      %v746 = vor.u32 1.1754944e-38, %v745
      %v747 = vsel %vm744, %v746, %v742
      %v748 = vmul.f32 1.0, %v747
      %v749 = vrcp.pop %v605
      %v750 = vmul.f32 %v605, %v749
      %v751 = vsub.f32 1.0, %v750
      %v752 = vmul.f32 %v749, %v751
      %v753 = vadd.f32 %v749, %v752
      %vm754 = vweird.f32 %v605
      %vm755 = vweird.f32 %v749
      %vm756 = vmor %vm754, %vm755
      %v757 = vsel %vm756, %v749, %v753
      %v758 = vand.u32 2147483647, %v605
      %vm759 = vcmp.eq.f32.partialorder %v758, 8.507059e+37
      %v760 = vand.u32 %v605, 2147483648
      %v761 = vor.u32 1.1754944e-38, %v760
      %v762 = vsel %vm759, %v761, %v757
      %v763 = vmul.f32 1.0, %v762
      %v764 = vmul.f32 %v694, %v748
      %v765 = vmul.f32 %v723, %v763
      %v766 = vmul.f32 %v697, %v748
      %v767 = vmul.f32 %v726, %v763
      %v768 = vmul.f32 %v700, %v748
      %v769 = vmul.f32 %v729, %v763
      %v770 = vmul.f32 %v703, %v748
      %v771 = vmul.f32 %v732, %v763
      %v772 = vadd.f32 %v510, %v764
      %v773 = vadd.f32 %v511, %v765
      %v774 = vadd.f32 %v512, %v766
      %v775 = vadd.f32 %v513, %v767
      %v776 = vadd.f32 %v514, %v768
      %v777 = vadd.f32 %v515, %v769
      %v778 = vadd.f32 %v516, %v770
      %v779 = vadd.f32 %v517, %v771
      %v780 = vadd.f32 %v772, %v774
      %v781 = vadd.f32 %v780, %v776
      %v782 = vadd.f32 %v781, %v778
      %v783 = vrot.slane %v782, 4
      %v784 = vadd.f32 %v782, %v783
      %v785 = vrot.slane %v784, 2
      %v786 = vadd.f32 %v784, %v785
      %v787 = vrot.slane %v786, 1
      %v788 = vadd.f32 %v786, %v787
      %v789 = vadd.f32 %v773, %v775
      %v790 = vadd.f32 %v789, %v777
      %v791 = vadd.f32 %v790, %v779
      %v792 = vrot.slane %v791, 4
      %v793 = vadd.f32 %v791, %v792
      %v794 = vrot.slane %v793, 2
      %v795 = vadd.f32 %v793, %v794
      %v796 = vrot.slane %v795, 1
      %v797 = vadd.f32 %v795, %v796
      %v798 = vrcp.pop 32.0
      %v799 = vmul.f32 32.0, %v798
      %v800 = vsub.f32 1.0, %v799
      %v801 = vmul.f32 %v798, %v800
      %v802 = vadd.f32 %v798, %v801
      %vm803 = vweird.f32 %v798
      %v804 = vsel %vm803, %v798, %v802
      %v805 = vmul.f32 %v788, %v804
      %v806 = vmul.f32 %v797, %v804
      %v807 = vsub.f32 %v772, %v805
      %v808 = vsub.f32 %v773, %v806
      %v809 = vsub.f32 %v774, %v805
      %v810 = vsub.f32 %v775, %v806
      %v811 = vsub.f32 %v776, %v805
      %v812 = vsub.f32 %v777, %v806
      %v813 = vsub.f32 %v778, %v805
      %v814 = vsub.f32 %v779, %v806
      %v815 = vmul.f32 %v807, %v807
      %v816 = vmul.f32 %v808, %v808
      %v817 = vmul.f32 %v809, %v809
      %v818 = vmul.f32 %v810, %v810
      %v819 = vmul.f32 %v811, %v811
      %v820 = vmul.f32 %v812, %v812
      %v821 = vmul.f32 %v813, %v813
      %v822 = vmul.f32 %v814, %v814
      %v823 = vadd.f32 %v815, %v817
      %v824 = vadd.f32 %v823, %v819
      %v825 = vadd.f32 %v824, %v821
      %v826 = vrot.slane %v825, 4
      %v827 = vadd.f32 %v825, %v826
      %v828 = vrot.slane %v827, 2
      %v829 = vadd.f32 %v827, %v828
      %v830 = vrot.slane %v829, 1
      %v831 = vadd.f32 %v829, %v830
      %v832 = vadd.f32 %v816, %v818
      %v833 = vadd.f32 %v832, %v820
      %v834 = vadd.f32 %v833, %v822
      %v835 = vrot.slane %v834, 4
      %v836 = vadd.f32 %v834, %v835
      %v837 = vrot.slane %v836, 2
      %v838 = vadd.f32 %v836, %v837
      %v839 = vrot.slane %v838, 1
      %v840 = vadd.f32 %v838, %v839
      %v841 = vmul.f32 %v831, %v804
      %v842 = vmul.f32 %v840, %v804
      %v843 = vadd.f32 %v841, 1e-05
      %v844 = vadd.f32 %v842, 1e-05
      %v845 = vrsqrt.pop %v843
      %v846 = vmul.f32 %v845, %v843
      %v847 = vmul.f32 %v846, %v845
      %v848 = vmul.f32 0.5, %v847
      %v849 = vsub.f32 1.5, %v848
      %v850 = vmul.f32 %v845, %v849
      %vm851 = vweird.f32 %v843
      %vm852 = vweird.f32 %v845
      %vm853 = vmor %vm851, %vm852
      %v854 = vsel %vm853, %v845, %v850
      %v855 = vrsqrt.pop %v844
      %v856 = vmul.f32 %v855, %v844
      %v857 = vmul.f32 %v856, %v855
      %v858 = vmul.f32 0.5, %v857
      %v859 = vsub.f32 1.5, %v858
      %v860 = vmul.f32 %v855, %v859
      %vm861 = vweird.f32 %v844
      %vm862 = vweird.f32 %v855
      %vm863 = vmor %vm861, %vm862
      %v864 = vsel %vm863, %v855, %v860
      %v865 = vmul.f32 %v807, %v854
      %v866 = vmul.f32 %v808, %v864
      %v867 = vmul.f32 %v809, %v854
      %v868 = vmul.f32 %v810, %v864
      %v869 = vmul.f32 %v811, %v854
      %v870 = vmul.f32 %v812, %v864
      %v871 = vmul.f32 %v813, %v854
      %v872 = vmul.f32 %v814, %v864
      %v873 = vld [vmem:[%s3] sm:$0xff]
      %v874 = vld [vmem:[%s3 + $0x8] sm:$0xff]
      %v875 = vld [vmem:[%s3 + $0x10] sm:$0xff]
      %v876 = vld [vmem:[%s3 + $0x18] sm:$0xff]
      %878 = vset.pattern.permute.xlu0 0
      %879 = vperm.xlu0 %878, %v873
      %v880 = vpop.permute.xlu0 %879
      %883 = vset.pattern.permute.xlu0 0
      %884 = vperm.xlu0 %883, %v874
      %v885 = vpop.permute.xlu0 %884
      %888 = vset.pattern.permute.xlu0 0
      %889 = vperm.xlu0 %888, %v875
      %v890 = vpop.permute.xlu0 %889
      %893 = vset.pattern.permute.xlu0 0
      %894 = vperm.xlu0 %893, %v876
      %v895 = vpop.permute.xlu0 %894
      %v897 = vmul.f32 %v865, %v880
      %v898 = vmul.f32 %v866, %v880
      %v899 = vmul.f32 %v867, %v885
      %v900 = vmul.f32 %v868, %v885
      %v901 = vmul.f32 %v869, %v890
      %v902 = vmul.f32 %v870, %v890
      %v903 = vmul.f32 %v871, %v895
      %v904 = vmul.f32 %v872, %v895
      %v905 = vld [vmem:[%s4] sm:$0xff]
      %v906 = vld [vmem:[%s4 + $0x8] sm:$0xff]
      %v907 = vld [vmem:[%s4 + $0x10] sm:$0xff]
      %v908 = vld [vmem:[%s4 + $0x18] sm:$0xff]
      %910 = vset.pattern.permute.xlu0 0
      %911 = vperm.xlu0 %910, %v905
      %v912 = vpop.permute.xlu0 %911
      %915 = vset.pattern.permute.xlu0 0
      %916 = vperm.xlu0 %915, %v906
      %v917 = vpop.permute.xlu0 %916
      %920 = vset.pattern.permute.xlu0 0
      %921 = vperm.xlu0 %920, %v907
      %v922 = vpop.permute.xlu0 %921
      %925 = vset.pattern.permute.xlu0 0
      %926 = vperm.xlu0 %925, %v908
      %v927 = vpop.permute.xlu0 %926
      %v929 = vadd.f32 %v897, %v912
      %v930 = vadd.f32 %v898, %v912
      %v931 = vadd.f32 %v899, %v917
      %v932 = vadd.f32 %v900, %v917
      %v933 = vadd.f32 %v901, %v922
      %v934 = vadd.f32 %v902, %v922
      %v935 = vadd.f32 %v903, %v927
      %v936 = vadd.f32 %v904, %v927
      %937 = vst [vmem:[%s224] sm:$0xff] %v929
      %938 = vst [vmem:[%s224 + $0x8] sm:$0xff] %v930
      %939 = vst [vmem:[%s224 + $0x10] sm:$0xff] %v931
      %940 = vst [vmem:[%s224 + $0x18] sm:$0xff] %v932
      %941 = vst [vmem:[%s224 + $0x20] sm:$0xff] %v933
      %942 = vst [vmem:[%s224 + $0x28] sm:$0xff] %v934
      %943 = vst [vmem:[%s224 + $0x30] sm:$0xff] %v935
      %944 = vst [vmem:[%s224 + $0x38] sm:$0xff] %v936
      %p945 = scmp.lt.s32.totalorder %s16, 1
      %s946 = scalar_select %p945, %s16, 1
      %s947 = smul.addr %s946, 8
      %s948 = smul.addr %s947, 8
      %s949 = scalar_lea.vmem %s5, %s948
      // Predicated region
      $region41: #{pairwise_projection.1} parent=39 // pred_check
        %p950 = pneg %p144
      $region42: #{pairwise_projection.1} parent=39 // pred_check_branch
        %952 = sbr.rel (%p950) target = $region44
      $region43: #{pairwise_projection.1} parent=39 // pred_region
        _
      $region44: #{pairwise_projection.1} parent=39 // pred_fallthru
        _
    $region40: #{pairwise_projection.1} parent=5 // pred_fallthru
      _
    %p953 = scmp.le.s32.totalorder 2, %s11
    // Predicated region
    $region45: #{pairwise_projection.1} parent=5 // pred_check
      %p954 = pneg %p953
    $region46: #{pairwise_projection.1} parent=5 // pred_check_branch
      %956 = sbr.rel (%p954) target = $region48
    $region47: #{pairwise_projection.1} parent=5 // pred_region
      %s957 = ssub.s32 %s11, 2
      // Predicated region
      $region49: #{pairwise_projection.1} parent=47 // pred_check
        %p958 = pneg %p150
      $region50: #{pairwise_projection.1} parent=47 // pred_check_branch
        %960 = sbr.rel (%p958) target = $region52
      $region51: #{pairwise_projection.1} parent=47 // pred_region
        %p961 = scmp.lt.s32.totalorder %s17, 1
        %s962 = scalar_select %p961, %s17, 1
        %s963 = smul.addr %s962, 8
        %s964 = smul.addr %s963, 8
        %s965 = scalar_lea.vmem %s5, %s964
      $region52: #{pairwise_projection.1} parent=47 // pred_fallthru
        _
    $region48: #{pairwise_projection.1} parent=5 // pred_fallthru
      _
  $region6: #{pairwise_projection.1} parent=0 // loop_footer
    %s15 = sadd.s32 1, %s11
  $region7: #{pairwise_projection.1} parent=0 // loop_footer_branch
    %10 = sbr.rel target = $region3
  $region8: #{pairwise_projection.1} parent=0 // loop_exit
    _

</llo_original>
